<compile_context>
chip_gen: v7x
topology: tpu7x:2x2x1
jax: 0.10.0
libtpu: 0.0.40
codegen_flags: <defaults>
</compile_context>

<pallas_src>
import jax
import jax.numpy as jnp
from jax.experimental import pallas as pl
from jax.experimental.pallas import tpu as pltpu

LANE = 128          # vreg lane width
BF16_SUBLANE = 16   # bf16 packs 2 rows/sublane -> (16, 128) tiles


def _round_up(x, m):
    return ((x + m - 1) // m) * m


def _dual_tensorcore():
    """Best-effort detection of a dual-TensorCore chip (v7x)."""
    try:
        kind = jax.devices()[0].device_kind.lower()
        return ("v7" in kind) or ("7x" in kind)
    except Exception:
        return False


def dqn_kernel(x_ref, w1_ref, w2_ref, w3_ref, b_ref, o_ref):
    """One batch tile: 3 chained MXU matmuls + VPU relu, all in VMEM.

    Weights arrive pre-cast to bf16 and stay VMEM-resident across the grid
    (constant index_map); activations are bf16, accumulation is f32.
    """
    x = x_ref[...]                                                       # bf16
    h1 = jnp.dot(x, w1_ref[...], preferred_element_type=jnp.float32) + b_ref[0:1, :]
    h1 = jnp.maximum(h1, 0.0).astype(jnp.bfloat16)

    h2 = jnp.dot(h1, w2_ref[...], preferred_element_type=jnp.float32) + b_ref[1:2, :]
    h2 = jnp.maximum(h2, 0.0).astype(jnp.bfloat16)

    out = jnp.dot(h2, w3_ref[...], preferred_element_type=jnp.float32) + b_ref[2:3, :]
    o_ref[...] = out.astype(o_ref.dtype)            # full 128-lane unmasked store


def deep_q_network(state, w1p, w2p, w3p, b_packed, *, n_actions,
                   block_batch=4096, out_dtype=jnp.float32, full_output=False):
    """Forward pass. `w1p/w2p/w3p/b_packed` come from prepare_params().

    Returns (batch, n_actions) by default; with full_output=True returns the
    padded (batch_p, width) slab so a downstream op (e.g. the DQN action
    gather) can fuse the selection instead of re-reading HBM to slice.
    """
    batch, in_dim = state.shape
    in_p, width = w1p.shape
    block_batch = max(_round_up(block_batch, BF16_SUBLANE), BF16_SUBLANE)

    # Grid: >= 2 steps on dual-TC chips (v7x) so both TensorCores get work;
    # otherwise the fewest tiles that respect block_batch.
    min_steps = 2 if (_dual_tensorcore() and batch >= 2 * BF16_SUBLANE) else 1
    num_tiles = max(pl.cdiv(batch, block_batch), min_steps)
    tb = _round_up(pl.cdiv(batch, num_tiles), BF16_SUBLANE)
    batch_p = num_tiles * tb

    # Pad batch to a multiple of tb, pad the feature dim to in_p and cast to
    # bf16 in one fused op (halves input DMA bytes, no in-kernel cast, no
    # partial / masked blocks).
    if batch_p == batch and in_dim == in_p and state.dtype == jnp.bfloat16:
        x = state
    else:
        x = jnp.zeros((batch_p, in_p), jnp.bfloat16).at[:batch, :in_dim].set(
            state.astype(jnp.bfloat16))

    out_itemsize = jnp.dtype(out_dtype).itemsize
    cost = pl.CostEstimate(
        flops=2 * batch_p * width * (in_p + 2 * width),
        transcendentals=0,
        bytes_accessed=(x.size * 2
                        + (w1p.size + w2p.size + w3p.size) * 2
                        + b_packed.size * 4
                        + batch_p * width * out_itemsize),
    )

    # Per-step VMEM: double-buffered activation tiles + resident weights.
    # Only raise the scoped limit if a very large tile actually needs it.
    vmem_bytes = (2 * (tb * in_p * 2 + tb * width * out_itemsize)
                  + 2 * ((w1p.size + w2p.size + w3p.size) * 2 + b_packed.size * 4))
    cp_kwargs = dict(dimension_semantics=("parallel",))
    if vmem_bytes > 24 * 1024 * 1024:
        cp_kwargs["vmem_limit_bytes"] = min(
            _round_up(vmem_bytes + (8 << 20), 1 << 20), 64 << 20)

    out = pl.pallas_call(
        dqn_kernel,
        out_shape=jax.ShapeDtypeStruct((batch_p, width), out_dtype),
        grid_spec=pltpu.PrefetchScalarGridSpec(
            num_scalar_prefetch=0,
            grid=(num_tiles,),
            in_specs=[
                pl.BlockSpec((tb, in_p), lambda i: (i, 0)),        # batch tile
                pl.BlockSpec((in_p, width), lambda i: (0, 0)),     # resident fc1 W
                pl.BlockSpec((width, width), lambda i: (0, 0)),    # resident fc2 W
                pl.BlockSpec((width, width), lambda i: (0, 0)),    # resident fc3 W
                pl.BlockSpec((3, width), lambda i: (0, 0)),        # resident biases
            ],
            out_specs=pl.BlockSpec((tb, width), lambda i: (i, 0)),
        ),
        compiler_params=pltpu.CompilerParams(**cp_kwargs),
        cost_estimate=cost,
    )(x, w1p, w2p, w3p, b_packed)

    if full_output:
        return out
    return out[:batch, :n_actions]


def init_params(key, input_dim, fc1_dims, fc2_dims, n_actions):
    """Deterministic init matching nn.Linear fan-in init (weights stored [in, out])."""
    ks = jax.random.split(key, 6)

    def linear(kw, kb, fan_in, fan_out):
        bound = 1.0 / jnp.sqrt(fan_in)
        w = jax.random.uniform(kw, (fan_in, fan_out), jnp.float32, -bound, bound)
        b = jax.random.uniform(kb, (1, fan_out), jnp.float32, -bound, bound)
        return w, b

    w1, b1 = linear(ks[0], ks[1], input_dim, fc1_dims)
    w2, b2 = linear(ks[2], ks[3], fc1_dims, fc2_dims)
    w3, b3 = linear(ks[4], ks[5], fc2_dims, n_actions)
    return w1, b1, w2, b2, w3, b3


def prepare_params(w1, b1, w2, b2, w3, b3):
    """Zero-pad feature dims (lane width / bf16 sublane), cast weights to bf16.
    Three separate weight slabs (no packed-slab slicing -> no bf16 (16,128)
    tile-boundary relayouts in the kernel) and one f32 bias slab [3, width].
    Done once; padded lanes/rows are zero so the forward math is unchanged."""
    input_dim, fc1_dims = w1.shape
    fc2_dims = w2.shape[1]
    n_actions = w3.shape[1]

    in_p = _round_up(input_dim, BF16_SUBLANE)
    width = max(_round_up(fc1_dims, LANE),
                _round_up(fc2_dims, LANE),
                _round_up(n_actions, LANE))

    bf16 = jnp.bfloat16
    w1p = jnp.zeros((in_p, width), bf16).at[:input_dim, :fc1_dims].set(w1.astype(bf16))
    w2p = jnp.zeros((width, width), bf16).at[:fc1_dims, :fc2_dims].set(w2.astype(bf16))
    w3p = jnp.zeros((width, width), bf16).at[:fc2_dims, :n_actions].set(w3.astype(bf16))

    b_packed = jnp.zeros((3, width), jnp.float32)
    b_packed = b_packed.at[0, :fc1_dims].set(b1[0])
    b_packed = b_packed.at[1, :fc2_dims].set(b2[0])
    b_packed = b_packed.at[2, :n_actions].set(b3[0])
    return w1p, w2p, w3p, b_packed


if __name__ == "__main__":
    # Small shapes consistent with the module: input_dims=(8,), fc1=32, fc2=32,
    # n_actions=4, batch=2.
    batch, input_dim, fc1_dims, fc2_dims, n_actions = 2, 8, 32, 32, 4

    key = jax.random.PRNGKey(0)
    k_state, k_params, k_big = jax.random.split(key, 3)
    state = jax.random.normal(k_state, (batch, input_dim), jnp.float32)

    raw_params = init_params(k_params, input_dim, fc1_dims, fc2_dims, n_actions)
    w1p, w2p, w3p, b_packed = prepare_params(*raw_params)

    actions = deep_q_network(state, w1p, w2p, w3p, b_packed, n_actions=n_actions)
    jax.block_until_ready(actions)
    assert actions.shape == (batch, n_actions)
    assert actions.dtype == jnp.float32

    def ref_bf16_math(s):
        """Reference mirroring kernel numerics (bf16 inputs, f32 accumulation)."""
        w1, b1, w2, b2, w3, b3 = raw_params
        bf16 = jnp.bfloat16
        r1 = jnp.maximum(jnp.dot(s.astype(bf16), w1.astype(bf16),
                                 preferred_element_type=jnp.float32) + b1, 0.0).astype(bf16)
        r2 = jnp.maximum(jnp.dot(r1, w2.astype(bf16),
                                 preferred_element_type=jnp.float32) + b2, 0.0).astype(bf16)
        return jnp.dot(r2, w3.astype(bf16), preferred_element_type=jnp.float32) + b3

    def ref_f32(s):
        """Pure-f32 PyTorch semantics."""
        w1, b1, w2, b2, w3, b3 = raw_params
        r = jnp.maximum(s @ w1 + b1, 0.0)
        r = jnp.maximum(r @ w2 + b2, 0.0)
        return r @ w3 + b3

    assert jnp.allclose(actions, ref_bf16_math(state), atol=1e-2, rtol=1e-2)
    assert jnp.max(jnp.abs(actions - ref_f32(state))) < 5e-2

    # Larger batch: exercises batch padding, a multi-tile grid (and on v7x the
    # dual-TensorCore split), plus the bf16-output fast path.
    big_batch = 300
    big_state = jax.random.normal(k_big, (big_batch, input_dim), jnp.float32)
    big_actions = deep_q_network(big_state, w1p, w2p, w3p, b_packed,
                                 n_actions=n_actions, block_batch=128)
    jax.block_until_ready(big_actions)
    assert big_actions.shape == (big_batch, n_actions)
    assert jnp.max(jnp.abs(big_actions - ref_f32(big_state))) < 5e-2

    big_bf16 = deep_q_network(big_state, w1p, w2p, w3p, b_packed,
                              n_actions=n_actions, block_batch=128,
                              out_dtype=jnp.bfloat16)
    jax.block_until_ready(big_bf16)
    assert big_bf16.shape == (big_batch, n_actions)
    assert big_bf16.dtype == jnp.bfloat16
    assert jnp.max(jnp.abs(big_bf16.astype(jnp.float32) - ref_f32(big_state))) < 6e-2

    print("KERNEL_OK")
</pallas_src>

<mosaic_0001>
module attributes {stable_mosaic.version = 11 : i64} {
  func.func @dqn_kernel(%arg0: i32, %arg1: memref<16x16xbf16, #tpu.memory_space<vmem>>, %arg2: memref<16x128xbf16, #tpu.memory_space<vmem>>, %arg3: memref<128x128xbf16, #tpu.memory_space<vmem>>, %arg4: memref<128x128xbf16, #tpu.memory_space<vmem>>, %arg5: memref<3x128xf32, #tpu.memory_space<vmem>>, %arg6: memref<16x128xf32, #tpu.memory_space<vmem>>) attributes {dimension_semantics = [#tpu.dimension_semantics<parallel>], iteration_bounds = array<i64: 1>, scalar_prefetch = 0 : i64, scratch_operands = 0 : i64, tpu.core_type = #tpu.core_type<tc>, window_params = [{transform_indices = @transform_0, window_bounds = array<i64: 16, 16>}, {pipeline_mode = #tpu.pipeline_mode<synchronous>, transform_indices = @transform_1, window_bounds = array<i64: 16, 128>}, {pipeline_mode = #tpu.pipeline_mode<synchronous>, transform_indices = @transform_2, window_bounds = array<i64: 128, 128>}, {pipeline_mode = #tpu.pipeline_mode<synchronous>, transform_indices = @transform_3, window_bounds = array<i64: 128, 128>}, {pipeline_mode = #tpu.pipeline_mode<synchronous>, transform_indices = @transform_4, window_bounds = array<i64: 3, 128>}, {transform_indices = @transform_5, window_bounds = array<i64: 16, 128>}]} {
    %c0 = arith.constant 0 : index
    %c0_0 = arith.constant 0 : index
    %0 = vector.load %arg1[%c0, %c0_0] : memref<16x16xbf16, #tpu.memory_space<vmem>>, vector<16x16xbf16>
    %c0_1 = arith.constant 0 : index
    %c0_2 = arith.constant 0 : index
    %1 = vector.load %arg2[%c0_1, %c0_2] : memref<16x128xbf16, #tpu.memory_space<vmem>>, vector<16x128xbf16>
    %cst = arith.constant dense<0.000000e+00> : vector<16x128xf32>
    %2 = tpu.matmul %0, %1, %cst {dimension_numbers = #tpu.dot_dimension_numbers<[1], [0], [0], [1], [0, 0, 1, 1], [], []>} : vector<16x16xbf16>, vector<16x128xbf16>, vector<16x128xf32> -> vector<16x128xf32>
    %c0_3 = arith.constant 0 : index
    %c0_4 = arith.constant 0 : index
    %3 = vector.load %arg5[%c0_3, %c0_4] : memref<3x128xf32, #tpu.memory_space<vmem>>, vector<1x128xf32>
    %4 = vector.broadcast %3 : vector<1x128xf32> to vector<16x128xf32>
    %5 = arith.addf %2, %4 : vector<16x128xf32>
    %cst_5 = arith.constant 0.000000e+00 : f32
    %6 = vector.broadcast %cst_5 : f32 to vector<16x128xf32>
    %7 = arith.maximumf %5, %6 : vector<16x128xf32>
    %8 = arith.truncf %7 : vector<16x128xf32> to vector<16x128xbf16>
    %c0_6 = arith.constant 0 : index
    %c0_7 = arith.constant 0 : index
    %9 = vector.load %arg3[%c0_6, %c0_7] : memref<128x128xbf16, #tpu.memory_space<vmem>>, vector<128x128xbf16>
    %cst_8 = arith.constant dense<0.000000e+00> : vector<16x128xf32>
    %10 = tpu.matmul %8, %9, %cst_8 {dimension_numbers = #tpu.dot_dimension_numbers<[1], [0], [0], [1], [0, 0, 1, 1], [], []>} : vector<16x128xbf16>, vector<128x128xbf16>, vector<16x128xf32> -> vector<16x128xf32>
    %c1 = arith.constant 1 : index
    %c0_9 = arith.constant 0 : index
    %11 = vector.load %arg5[%c1, %c0_9] : memref<3x128xf32, #tpu.memory_space<vmem>>, vector<1x128xf32>
    %12 = vector.broadcast %11 : vector<1x128xf32> to vector<16x128xf32>
    %13 = arith.addf %10, %12 : vector<16x128xf32>
    %cst_10 = arith.constant 0.000000e+00 : f32
    %14 = vector.broadcast %cst_10 : f32 to vector<16x128xf32>
    %15 = arith.maximumf %13, %14 : vector<16x128xf32>
    %16 = arith.truncf %15 : vector<16x128xf32> to vector<16x128xbf16>
    %c0_11 = arith.constant 0 : index
    %c0_12 = arith.constant 0 : index
    %17 = vector.load %arg4[%c0_11, %c0_12] : memref<128x128xbf16, #tpu.memory_space<vmem>>, vector<128x128xbf16>
    %cst_13 = arith.constant dense<0.000000e+00> : vector<16x128xf32>
    %18 = tpu.matmul %16, %17, %cst_13 {dimension_numbers = #tpu.dot_dimension_numbers<[1], [0], [0], [1], [0, 0, 1, 1], [], []>} : vector<16x128xbf16>, vector<128x128xbf16>, vector<16x128xf32> -> vector<16x128xf32>
    %c2 = arith.constant 2 : index
    %c0_14 = arith.constant 0 : index
    %19 = vector.load %arg5[%c2, %c0_14] : memref<3x128xf32, #tpu.memory_space<vmem>>, vector<1x128xf32>
    %20 = vector.broadcast %19 : vector<1x128xf32> to vector<16x128xf32>
    %21 = arith.addf %18, %20 : vector<16x128xf32>
    %c0_15 = arith.constant 0 : index
    %c0_16 = arith.constant 0 : index
    %22 = vector.load %arg6[%c0_15, %c0_16] : memref<16x128xf32, #tpu.memory_space<vmem>>, vector<16x128xf32>
    tpu.vector_store %arg6[%c0_15, %c0_16], %21 {strides = array<i32>} : memref<16x128xf32, #tpu.memory_space<vmem>>, vector<16x128xf32>,
    return
  }
  func.func @transform_0(%arg0: i32) -> (i32, i32) {
    %c0_i32 = arith.constant 0 : i32
    %c0_i32_0 = arith.constant 0 : i32
    return %arg0, %c0_i32 : i32, i32
  }
  func.func @transform_1(%arg0: i32) -> (i32, i32) {
    %c0_i32 = arith.constant 0 : i32
    %c0_i32_0 = arith.constant 0 : i32
    %c0_i32_1 = arith.constant 0 : i32
    return %c0_i32, %c0_i32_0 : i32, i32
  }
  func.func @transform_2(%arg0: i32) -> (i32, i32) {
    %c0_i32 = arith.constant 0 : i32
    %c0_i32_0 = arith.constant 0 : i32
    %c0_i32_1 = arith.constant 0 : i32
    return %c0_i32, %c0_i32_0 : i32, i32
  }
  func.func @transform_3(%arg0: i32) -> (i32, i32) {
    %c0_i32 = arith.constant 0 : i32
    %c0_i32_0 = arith.constant 0 : i32
    %c0_i32_1 = arith.constant 0 : i32
    return %c0_i32, %c0_i32_0 : i32, i32
  }
  func.func @transform_4(%arg0: i32) -> (i32, i32) {
    %c0_i32 = arith.constant 0 : i32
    %c0_i32_0 = arith.constant 0 : i32
    %c0_i32_1 = arith.constant 0 : i32
    return %c0_i32, %c0_i32_0 : i32, i32
  }
  func.func @transform_5(%arg0: i32) -> (i32, i32) {
    %c0_i32 = arith.constant 0 : i32
    %c0_i32_0 = arith.constant 0 : i32
    return %arg0, %c0_i32 : i32, i32
  }
}

</mosaic_0001>

<llo_original>
// kernel: tpu_custom_call.1
$region0: #{tpu_custom_call.1}
  #allocation0 [shape = 'u32[]', space=smem, size = 0x4, offset = 0x4, fixed_abs, tag = 'smem constant byte address 0x4 - core index']
  #allocation1 [shape = 'u32[144,128]{1,0:T(1,128)}', space=vmem, size = 0x12000, scoped, tag = 'internal scratch']
  %s0 = inlined_call_operand.hbm [shape: bf16[16,16], index: 0, kind: input, shape index: {}]
  %s1 = inlined_call_operand.hbm [shape: bf16[16,128], index: 1, kind: input, shape index: {}]
  %s2 = inlined_call_operand.hbm [shape: bf16[128,128], index: 2, kind: input, shape index: {}]
  %s3 = inlined_call_operand.hbm [shape: bf16[128,128], index: 3, kind: input, shape index: {}]
  %s4 = inlined_call_operand.vmem [shape: f32[3,128], index: 4, kind: input, shape index: {}]
  %s5 = inlined_call_operand.hbm [shape: f32[16,128], index: 5, kind: output, shape index: {}]
  %s6 = sld [smem:[#allocation0]]
  $region46: #{tpu_custom_call.1} parent=0
    _
  %s8 = ssub.s32 1, %s6
  %s9 = scalar_select 0, %s8, %s6
  $region1: #{tpu_custom_call.1} parent=0
    #allocation2 [shape = 'u8[4096]{0}', space=vmem, size = 0x1000, scoped, tag = 'input window, operand 0, single buffered']
    #allocation3 [shape = 's32[1]{0}', space=sflag, size = 0x4, scoped, tag = 'scoped memory for tpu_custom_call.1']
    #allocation4 [shape = 's32[1]{0}', space=sflag, size = 0x4, scoped, tag = 'scoped memory for tpu_custom_call.1']
    #allocation5 [shape = 'u8[4096]{0}', space=vmem, size = 0x1000, scoped, tag = 'input window, operand 1, single buffered']
    #allocation6 [shape = 's32[1]{0}', space=sflag, size = 0x4, scoped, tag = 'scoped memory for tpu_custom_call.1']
    #allocation7 [shape = 'u8[32768]{0}', space=vmem, size = 0x8000, scoped, tag = 'input window, operand 2, single buffered']
    #allocation8 [shape = 'u8[32768]{0}', space=vmem, size = 0x8000, scoped, tag = 'input window, operand 3, single buffered']
    #allocation9 [shape = 's32[1]{0}', space=sflag, size = 0x4, scoped, tag = 'scoped memory for tpu_custom_call.1']
    #allocation10 [shape = 'u8[8192]{0}', space=vmem, size = 0x2000, scoped, tag = 'output window, operand 0, single buffered']
    %10 = vsyncpa [#allocation3], 0
    %11 = vsyncpa [#allocation6], 0
    %12 = vsyncpa [#allocation9], 0
    %13 = vsyncpa [#allocation4], 0
    // Predicated region
    $region2: #{tpu_custom_call.1} parent=1 // pred_check
      _
    $region3: #{tpu_custom_call.1} parent=1 // pred_check_branch
      %15 = sbr.rel (0) target = $region5
    $region4: #{tpu_custom_call.1} parent=1 // pred_region
      %s17 = ssub.s32 128, 128
      %18 = vsyncadd [#allocation3], %s17
      %s19 = sshll.u32 [#allocation2], 4
      %s20 = int_to_ptr.vmem [resolvable:$true] %s19
      %25 = dma.hbm_to_vmem [thread:$0]  %s0, 128, %s20, [#allocation3], 64, 64, 4
    $region5: #{tpu_custom_call.1} parent=1 // pred_fallthru
      _
    // Predicated region
    $region6: #{tpu_custom_call.1} parent=1 // pred_check
      _
    $region7: #{tpu_custom_call.1} parent=1 // pred_check_branch
      %27 = sbr.rel (0) target = $region9
    $region8: #{tpu_custom_call.1} parent=1 // pred_region
      %s29 = ssub.s32 128, 128
      %30 = vsyncadd [#allocation6], %s29
      %s31 = sshll.u32 [#allocation5], 4
      %s32 = int_to_ptr.vmem [resolvable:$true] %s31
      %37 = dma.hbm_to_vmem [thread:$0]  %s1, 128, %s32, [#allocation6], 64, 64, 4
    $region9: #{tpu_custom_call.1} parent=1 // pred_fallthru
      _
    // Predicated region
    $region10: #{tpu_custom_call.1} parent=1 // pred_check
      _
    $region11: #{tpu_custom_call.1} parent=1 // pred_check_branch
      %39 = sbr.rel (0) target = $region13
    $region12: #{tpu_custom_call.1} parent=1 // pred_region
      %s41 = ssub.s32 1024, 1024
      %42 = vsyncadd [#allocation6], %s41
      %s43 = sshll.u32 [#allocation7], 4
      %s44 = int_to_ptr.vmem [resolvable:$true] %s43
      %49 = dma.hbm_to_vmem [thread:$0]  %s2, 1024, %s44, [#allocation6], 64, 64, 4
    $region13: #{tpu_custom_call.1} parent=1 // pred_fallthru
      _
    // Predicated region
    $region14: #{tpu_custom_call.1} parent=1 // pred_check
      _
    $region15: #{tpu_custom_call.1} parent=1 // pred_check_branch
      %51 = sbr.rel (0) target = $region17
    $region16: #{tpu_custom_call.1} parent=1 // pred_region
      %s53 = ssub.s32 1024, 1024
      %54 = vsyncadd [#allocation9], %s53
      %s55 = sshll.u32 [#allocation8], 4
      %s56 = int_to_ptr.vmem [resolvable:$true] %s55
      %61 = dma.hbm_to_vmem [thread:$0]  %s3, 1024, %s56, [#allocation9], 64, 64, 4
    $region17: #{tpu_custom_call.1} parent=1 // pred_fallthru
      _
    // Predicated region
    $region18: #{tpu_custom_call.1} parent=1 // pred_check
      _
    $region19: #{tpu_custom_call.1} parent=1 // pred_check_branch
      %63 = sbr.rel (0) target = $region21
    $region20: #{tpu_custom_call.1} parent=1 // pred_region
      _
    $region21: #{tpu_custom_call.1} parent=1 // pred_fallthru
      _
    // Predicated region
    $region22: #{tpu_custom_call.1} parent=1 // pred_check
      _
    $region23: #{tpu_custom_call.1} parent=1 // pred_check_branch
      %65 = sbr.rel (0) target = $region25
    $region24: #{tpu_custom_call.1} parent=1 // pred_region
      %66 = dma.done [#allocation3], 128
    $region25: #{tpu_custom_call.1} parent=1 // pred_fallthru
      _
    // Predicated region
    $region26: #{tpu_custom_call.1} parent=1 // pred_check
      _
    $region27: #{tpu_custom_call.1} parent=1 // pred_check_branch
      %68 = sbr.rel (0) target = $region29
    $region28: #{tpu_custom_call.1} parent=1 // pred_region
      %69 = dma.done [#allocation6], 128
    $region29: #{tpu_custom_call.1} parent=1 // pred_fallthru
      _
    // Predicated region
    $region30: #{tpu_custom_call.1} parent=1 // pred_check
      _
    $region31: #{tpu_custom_call.1} parent=1 // pred_check_branch
      %71 = sbr.rel (0) target = $region33
    $region32: #{tpu_custom_call.1} parent=1 // pred_region
      %72 = dma.done [#allocation6], 1024
    $region33: #{tpu_custom_call.1} parent=1 // pred_fallthru
      _
    // Predicated region
    $region34: #{tpu_custom_call.1} parent=1 // pred_check
      _
    $region35: #{tpu_custom_call.1} parent=1 // pred_check_branch
      %74 = sbr.rel (0) target = $region37
    $region36: #{tpu_custom_call.1} parent=1 // pred_region
      %75 = dma.done [#allocation9], 1024
    $region37: #{tpu_custom_call.1} parent=1 // pred_fallthru
      _
    %v77 = vld [vmem:[#allocation2] sm:$0xf]
    %v78 = vld [vmem:[#allocation2 + $0x4] sm:$0xf]
    %v79 = vld [vmem:[#allocation5] sm:$0xf]
    %v80 = vld [vmem:[#allocation5 + $0x4] sm:$0xf]
    %v81 = vld [vmem:[%s4] sm:$0x1]
    %v82 = vlaneseq
    %v83 = vshrl.u32 %v82, 7
    %v84 = vsub.s32 0, %v83
    %v85 = vrot.slane %v81, %v84
    %v88 = vunpack.c.l.b16 %v77
    %v89 = vunpack.c.l.b16 %v78
    %v90 = vpack.c.b16 %v89, %v88
    %v93 = vunpack.c.l.b16 %v79
    %v94 = vunpack.c.l.b16 %v80
    %v95 = vpack.c.b16 %v94, %v93
    %vm97 = vcmask 130048
    %v99 = vsel %vm97, %v90, 0
    %101 = vmatprep.subr.bf16.mxu0 0
    %102 = vmatpush1.bf16.msra.mxu0 %v95
    %103 = vmatprep.subr.bf16.mxu0 0
    %104 = vmatpush1.bf16.msra.mxu0 0
    %105 = vmatprep.subr.bf16.mxu0 0
    %106 = vmatpush1.bf16.msra.mxu0 0
    %107 = vmatprep.subr.bf16.mxu0 0
    %108 = vmatpush1.bf16.msra.mxu0 0
    %109 = vmatprep.subr.bf16.mxu0 0
    %110 = vmatpush1.bf16.msra.mxu0 0
    %111 = vmatprep.subr.bf16.mxu0 0
    %112 = vmatpush1.bf16.msra.mxu0 0
    %113 = vmatprep.subr.bf16.mxu0 0
    %114 = vmatpush1.bf16.msra.mxu0 0
    %115 = vmatprep.subr.bf16.mxu0 0
    %116 = vmatpush1.bf16.msra.mxu0 0
    %117 = vmatprep.subr.bf16.mxu0 0
    %118 = vmatpush1.bf16.msra.mxu0 0
    %119 = vmatprep.subr.bf16.mxu0 0
    %120 = vmatpush1.bf16.msra.mxu0 0
    %121 = vmatprep.subr.bf16.mxu0 0
    %122 = vmatpush1.bf16.msra.mxu0 0
    %123 = vmatprep.subr.bf16.mxu0 0
    %124 = vmatpush1.bf16.msra.mxu0 0
    %125 = vmatprep.subr.bf16.mxu0 0
    %126 = vmatpush1.bf16.msra.mxu0 0
    %127 = vmatprep.subr.bf16.mxu0 0
    %128 = vmatpush1.bf16.msra.mxu0 0
    %129 = vmatprep.subr.bf16.mxu0 0
    %130 = vmatpush1.bf16.msra.mxu0 0
    %131 = vmatprep.subr.bf16.mxu0 0
    %132 = vmatpush1.bf16.msra.mxu0 0
    %133 = vmatprep.mubr.bf16.mxu0 0
    %134 = vmatmul.mubr.bf16.gmra.mrb[0].mxu0 %v99
    %v135 = vpop.f32.mrb[0].mxu0
    %v136 = vadd.f32 %v85, %v135
    %v137 = vpop.f32.mrb[0].mxu0
    %v138 = vpop.f32.mrb[0].mxu0
    %v139 = vadd.f32 %v85, %v138
    %v140 = vpop.f32.mrb[0].mxu0
    %141 = vdwg.mxu0
    %v142 = vmax.f32 %v136, 0.0
    %v143 = vmax.f32 %v139, 0.0
    %v144 = vpack.c.bf16 %v143, %v142
    %v145 = vld [vmem:[#allocation7] sm:$0xf]
    %v146 = vld [vmem:[#allocation7 + $0x4] sm:$0xf]
    %v147 = vld [vmem:[#allocation7 + $0x8] sm:$0xf]
    %v148 = vld [vmem:[#allocation7 + $0xc] sm:$0xf]
    %v149 = vld [vmem:[#allocation7 + $0x10] sm:$0xf]
    %v150 = vld [vmem:[#allocation7 + $0x14] sm:$0xf]
    %v151 = vld [vmem:[#allocation7 + $0x18] sm:$0xf]
    %v152 = vld [vmem:[#allocation7 + $0x1c] sm:$0xf]
    %v153 = vld [vmem:[#allocation7 + $0x20] sm:$0xf]
    %v154 = vld [vmem:[#allocation7 + $0x24] sm:$0xf]
    %v155 = vld [vmem:[#allocation7 + $0x28] sm:$0xf]
    %v156 = vld [vmem:[#allocation7 + $0x2c] sm:$0xf]
    %v157 = vld [vmem:[#allocation7 + $0x30] sm:$0xf]
    %v158 = vld [vmem:[#allocation7 + $0x34] sm:$0xf]
    %v159 = vld [vmem:[#allocation7 + $0x38] sm:$0xf]
    %v160 = vld [vmem:[#allocation7 + $0x3c] sm:$0xf]
    %v161 = vld [vmem:[%s4 + $0x1] sm:$0x1]
    %v162 = vlaneseq
    %v163 = vshrl.u32 %v162, 7
    %v164 = vsub.s32 0, %v163
    %v165 = vrot.slane %v161, %v164
    %v182 = vunpack.c.l.b16 %v145
    %v183 = vunpack.c.l.b16 %v146
    %v184 = vunpack.c.l.b16 %v147
    %v185 = vunpack.c.l.b16 %v148
    %v186 = vunpack.c.l.b16 %v149
    %v187 = vunpack.c.l.b16 %v150
    %v188 = vunpack.c.l.b16 %v151
    %v189 = vunpack.c.l.b16 %v152
    %v190 = vunpack.c.l.b16 %v153
    %v191 = vunpack.c.l.b16 %v154
    %v192 = vunpack.c.l.b16 %v155
    %v193 = vunpack.c.l.b16 %v156
    %v194 = vunpack.c.l.b16 %v157
    %v195 = vunpack.c.l.b16 %v158
    %v196 = vunpack.c.l.b16 %v159
    %v197 = vunpack.c.l.b16 %v160
    %v198 = vpack.c.b16 %v183, %v182
    %v199 = vpack.c.b16 %v185, %v184
    %v200 = vpack.c.b16 %v187, %v186
    %v201 = vpack.c.b16 %v189, %v188
    %v202 = vpack.c.b16 %v191, %v190
    %v203 = vpack.c.b16 %v193, %v192
    %v204 = vpack.c.b16 %v195, %v194
    %v205 = vpack.c.b16 %v197, %v196
    %214 = vmatprep.subr.bf16.mxu0 0
    %215 = vmatpush1.bf16.msra.mxu0 %v198
    %216 = vmatprep.subr.bf16.mxu0 0
    %217 = vmatpush1.bf16.msra.mxu0 %v199
    %218 = vmatprep.subr.bf16.mxu0 0
    %219 = vmatpush1.bf16.msra.mxu0 %v200
    %220 = vmatprep.subr.bf16.mxu0 0
    %221 = vmatpush1.bf16.msra.mxu0 %v201
    %222 = vmatprep.subr.bf16.mxu0 0
    %223 = vmatpush1.bf16.msra.mxu0 %v202
    %224 = vmatprep.subr.bf16.mxu0 0
    %225 = vmatpush1.bf16.msra.mxu0 %v203
    %226 = vmatprep.subr.bf16.mxu0 0
    %227 = vmatpush1.bf16.msra.mxu0 %v204
    %228 = vmatprep.subr.bf16.mxu0 0
    %229 = vmatpush1.bf16.msra.mxu0 %v205
    %230 = vmatprep.subr.bf16.mxu0 0
    %231 = vmatpush1.bf16.msra.mxu0 0
    %232 = vmatprep.subr.bf16.mxu0 0
    %233 = vmatpush1.bf16.msra.mxu0 0
    %234 = vmatprep.subr.bf16.mxu0 0
    %235 = vmatpush1.bf16.msra.mxu0 0
    %236 = vmatprep.subr.bf16.mxu0 0
    %237 = vmatpush1.bf16.msra.mxu0 0
    %238 = vmatprep.subr.bf16.mxu0 0
    %239 = vmatpush1.bf16.msra.mxu0 0
    %240 = vmatprep.subr.bf16.mxu0 0
    %241 = vmatpush1.bf16.msra.mxu0 0
    %242 = vmatprep.subr.bf16.mxu0 0
    %243 = vmatpush1.bf16.msra.mxu0 0
    %244 = vmatprep.subr.bf16.mxu0 0
    %245 = vmatpush1.bf16.msra.mxu0 0
    %246 = vmatprep.mubr.bf16.mxu0 0
    %247 = vmatmul.mubr.bf16.gmra.mrb[0].mxu0 %v144
    %v248 = vpop.f32.mrb[0].mxu0
    %v249 = vadd.f32 %v165, %v248
    %v250 = vpop.f32.mrb[0].mxu0
    %v251 = vpop.f32.mrb[0].mxu0
    %v252 = vadd.f32 %v165, %v251
    %v253 = vpop.f32.mrb[0].mxu0
    %254 = vdwg.mxu0
    %v255 = vmax.f32 %v249, 0.0
    %v256 = vmax.f32 %v252, 0.0
    %v257 = vpack.c.bf16 %v256, %v255
    %v258 = vld [vmem:[#allocation8] sm:$0xf]
    %v259 = vld [vmem:[#allocation8 + $0x4] sm:$0xf]
    %v260 = vld [vmem:[#allocation8 + $0x8] sm:$0xf]
    %v261 = vld [vmem:[#allocation8 + $0xc] sm:$0xf]
    %v262 = vld [vmem:[#allocation8 + $0x10] sm:$0xf]
    %v263 = vld [vmem:[#allocation8 + $0x14] sm:$0xf]
    %v264 = vld [vmem:[#allocation8 + $0x18] sm:$0xf]
    %v265 = vld [vmem:[#allocation8 + $0x1c] sm:$0xf]
    %v266 = vld [vmem:[#allocation8 + $0x20] sm:$0xf]
    %v267 = vld [vmem:[#allocation8 + $0x24] sm:$0xf]
    %v268 = vld [vmem:[#allocation8 + $0x28] sm:$0xf]
    %v269 = vld [vmem:[#allocation8 + $0x2c] sm:$0xf]
    %v270 = vld [vmem:[#allocation8 + $0x30] sm:$0xf]
    %v271 = vld [vmem:[#allocation8 + $0x34] sm:$0xf]
    %v272 = vld [vmem:[#allocation8 + $0x38] sm:$0xf]
    %v273 = vld [vmem:[#allocation8 + $0x3c] sm:$0xf]
    %v274 = vld [vmem:[%s4 + $0x2] sm:$0x1]
    %v275 = vlaneseq
    %v276 = vshrl.u32 %v275, 7
    %v277 = vsub.s32 0, %v276
    %v278 = vrot.slane %v274, %v277
    %v295 = vunpack.c.l.b16 %v258
    %v296 = vunpack.c.l.b16 %v259
    %v297 = vunpack.c.l.b16 %v260
    %v298 = vunpack.c.l.b16 %v261
    %v299 = vunpack.c.l.b16 %v262
    %v300 = vunpack.c.l.b16 %v263
    %v301 = vunpack.c.l.b16 %v264
    %v302 = vunpack.c.l.b16 %v265
    %v303 = vunpack.c.l.b16 %v266
    %v304 = vunpack.c.l.b16 %v267
    %v305 = vunpack.c.l.b16 %v268
    %v306 = vunpack.c.l.b16 %v269
    %v307 = vunpack.c.l.b16 %v270
    %v308 = vunpack.c.l.b16 %v271
    %v309 = vunpack.c.l.b16 %v272
    %v310 = vunpack.c.l.b16 %v273
    %v311 = vpack.c.b16 %v296, %v295
    %v312 = vpack.c.b16 %v298, %v297
    %v313 = vpack.c.b16 %v300, %v299
    %v314 = vpack.c.b16 %v302, %v301
    %v315 = vpack.c.b16 %v304, %v303
    %v316 = vpack.c.b16 %v306, %v305
    %v317 = vpack.c.b16 %v308, %v307
    %v318 = vpack.c.b16 %v310, %v309
    %327 = vmatprep.subr.bf16.mxu0 0
    %328 = vmatpush1.bf16.msra.mxu0 %v311
    %329 = vmatprep.subr.bf16.mxu0 0
    %330 = vmatpush1.bf16.msra.mxu0 %v312
    %331 = vmatprep.subr.bf16.mxu0 0
    %332 = vmatpush1.bf16.msra.mxu0 %v313
    %333 = vmatprep.subr.bf16.mxu0 0
    %334 = vmatpush1.bf16.msra.mxu0 %v314
    %335 = vmatprep.subr.bf16.mxu0 0
    %336 = vmatpush1.bf16.msra.mxu0 %v315
    %337 = vmatprep.subr.bf16.mxu0 0
    %338 = vmatpush1.bf16.msra.mxu0 %v316
    %339 = vmatprep.subr.bf16.mxu0 0
    %340 = vmatpush1.bf16.msra.mxu0 %v317
    %341 = vmatprep.subr.bf16.mxu0 0
    %342 = vmatpush1.bf16.msra.mxu0 %v318
    %343 = vmatprep.subr.bf16.mxu0 0
    %344 = vmatpush1.bf16.msra.mxu0 0
    %345 = vmatprep.subr.bf16.mxu0 0
    %346 = vmatpush1.bf16.msra.mxu0 0
    %347 = vmatprep.subr.bf16.mxu0 0
    %348 = vmatpush1.bf16.msra.mxu0 0
    %349 = vmatprep.subr.bf16.mxu0 0
    %350 = vmatpush1.bf16.msra.mxu0 0
    %351 = vmatprep.subr.bf16.mxu0 0
    %352 = vmatpush1.bf16.msra.mxu0 0
    %353 = vmatprep.subr.bf16.mxu0 0
    %354 = vmatpush1.bf16.msra.mxu0 0
    %355 = vmatprep.subr.bf16.mxu0 0
    %356 = vmatpush1.bf16.msra.mxu0 0
    %357 = vmatprep.subr.bf16.mxu0 0
    %358 = vmatpush1.bf16.msra.mxu0 0
    %359 = vmatprep.mubr.bf16.mxu0 0
    %360 = vmatmul.mubr.bf16.gmra.mrb[0].mxu0 %v257
    %v361 = vpop.f32.mrb[0].mxu0
    %v362 = vadd.f32 %v278, %v361
    %v363 = vpop.f32.mrb[0].mxu0
    %v364 = vpop.f32.mrb[0].mxu0
    %v365 = vadd.f32 %v278, %v364
    %v366 = vpop.f32.mrb[0].mxu0
    %367 = vdwg.mxu0
    %368 = vst [vmem:[#allocation10] sm:$0xff] %v362
    %369 = vst [vmem:[#allocation10 + $0x8] sm:$0xff] %v365
    // Predicated region
    $region38: #{tpu_custom_call.1} parent=1 // pred_check
      _
    $region39: #{tpu_custom_call.1} parent=1 // pred_check_branch
      %371 = sbr.rel (0) target = $region41
    $region40: #{tpu_custom_call.1} parent=1 // pred_region
      %s373 = ssub.s32 256, 256
      %374 = vsyncadd [#allocation4], %s373
      %s375 = sshll.u32 [#allocation10], 4
      %s376 = int_to_ptr.vmem [resolvable:$true] %s375
      %381 = dma.vmem_to_hbm [thread:$0]  %s376, 256, %s5, [#allocation4], 128, 128, 8
    $region41: #{tpu_custom_call.1} parent=1 // pred_fallthru
      _
    // Predicated region
    $region42: #{tpu_custom_call.1} parent=1 // pred_check
      _
    $region43: #{tpu_custom_call.1} parent=1 // pred_check_branch
      %383 = sbr.rel (0) target = $region45
    $region44: #{tpu_custom_call.1} parent=1 // pred_region
      %384 = dma.done [#allocation4], 256
    $region45: #{tpu_custom_call.1} parent=1 // pred_fallthru
      _
    %385 = vsyncpa [#allocation3], 1
    %386 = vsyncpa [#allocation6], 1
    %387 = vsyncpa [#allocation9], 1
    %388 = vsyncpa [#allocation4], 1

</llo_original>
